<compile_context>
chip_gen: v7x
topology: tpu7x:2x2x1
jax: 0.10.0
libtpu: 0.0.40
codegen_flags: <defaults>
</compile_context>

<pallas_src>
import math
import functools

import jax
import jax.numpy as jnp
from jax.experimental import pallas as pl
from jax.experimental.pallas import tpu as pltpu

_GELU_C = math.sqrt(2.0 / math.pi)
_MIB = 1024 * 1024


def _round_up(x: int, m: int) -> int:
    return ((x + m - 1) // m) * m


def _itemsize(dt) -> int:
    return jnp.dtype(dt).itemsize


def _vmem_budget_bytes() -> int:
    """VMEM budget for tile sizing. Safe default fits v7x (64 MiB/TC); raised
    when the hardware query reports more physical VMEM (v5e/v6e: 128 MiB)."""
    budget = 48 * _MIB
    try:
        cap = getattr(pltpu.get_tpu_info(), "vmem_capacity_bytes", None)
        if cap:
            budget = max(32 * _MIB, min(int(cap * 0.80), 112 * _MIB))
    except Exception:
        pass
    return budget


# ----------------------------------------------------------------------------
# kernels
# ----------------------------------------------------------------------------
def _gelu_tanh_f32(g):
    # 0.5 * g * (1 + tanh(sqrt(2/pi) * (g + 0.044715 * g^3))); cube as two VPU
    # multiplies, tanh on the EUP slot, all in f32 (accumulator dtype).
    g3 = g * g * g
    return 0.5 * g * (1.0 + jnp.tanh(_GELU_C * (g + 0.044715 * g3)))


def _ffn_kernel_single(x_ref, w1g_ref, w2_ref, o_ref):
    # Whole hidden dimension resident in VMEM: one fused fc1|gate GEMM, gated
    # GELU, one fc2 GEMM, write the output tile directly (no accumulator).
    h12 = jnp.dot(x_ref[...], w1g_ref[...], preferred_element_type=jnp.float32)
    tf = h12.shape[1] // 2
    h = (h12[:, :tf] * _gelu_tanh_f32(h12[:, tf:])).astype(w2_ref.dtype)
    o_ref[...] = jnp.dot(
        h, w2_ref[...], preferred_element_type=jnp.float32
    ).astype(o_ref.dtype)


def _ffn_kernel_reduce(x_ref, w1g_ref, w2_ref, o_ref, acc_ref):
    # x_ref   : (tm, C)       token tile (native dtype)
    # w1g_ref : (C, 2*tf)     [W1_tile_k | Wg_tile_k] fused fc1+gate weight tile
    # w2_ref  : (tf, C)       fc2 weight tile
    # acc_ref : (tm, C) f32   accumulator over the F (hidden) reduction axis
    k = pl.program_id(1)

    @pl.when(k == 0)
    def _():
        acc_ref[...] = jnp.zeros_like(acc_ref)

    h12 = jnp.dot(x_ref[...], w1g_ref[...], preferred_element_type=jnp.float32)
    tf = h12.shape[1] // 2
    # Cast intermediate back to the weight dtype so the second GEMM runs at
    # native MXU throughput (bf16 when weights are bf16); accumulate in f32.
    h = (h12[:, :tf] * _gelu_tanh_f32(h12[:, tf:])).astype(w2_ref.dtype)
    acc_ref[...] += jnp.dot(h, w2_ref[...], preferred_element_type=jnp.float32)

    @pl.when(k == pl.num_programs(1) - 1)
    def _():
        o_ref[...] = acc_ref[...].astype(o_ref.dtype)


# ----------------------------------------------------------------------------
# parameter prep (hoisted out of the per-call forward path)
# ----------------------------------------------------------------------------
def prepare_t5_ffn_weights(w1_t, wg_t, w2_t, *, tf=None, vmem_budget=None):
    """Pad the hidden dim and fuse W1|Wg into one [C, 2*F_pad] operand.

    w1_t / wg_t: [C, F] (torch weights transposed), w2_t: [F, C].
    Returns (w1g, w2_pad, tf) where tf is the hidden-tile width used by the
    kernel (tf == F_pad means the whole hidden dim fits VMEM -> single-pass).
    Call this once at parameter-prep time, not per forward call.
    """
    C, F = w1_t.shape
    wb = _itemsize(w1_t.dtype)
    if vmem_budget is None:
        vmem_budget = _vmem_budget_bytes()

    if tf is None:
        F128 = _round_up(F, 128)
        # Double-buffered weight bytes if we keep the whole hidden dim resident.
        full_w_bytes = 2 * (C * 2 * F128 + F128 * C) * wb
        if full_w_bytes <= int(0.40 * vmem_budget):
            tf = F128  # nk == 1: drop the F reduction axis entirely
        else:
            tf = 128
            for cand in (512, 256, 128):
                if 2 * 3 * C * cand * wb <= int(0.35 * vmem_budget):
                    tf = cand
                    break
    assert tf % 128 == 0, "tf must be a multiple of 128 (lane width)"

    F_pad = _round_up(F, tf)
    if F_pad != F:
        # Zero-padded hidden units contribute exactly zero through the gated
        # GELU and W2, so padding is numerically exact.
        w1_t = jnp.pad(w1_t, ((0, 0), (0, F_pad - F)))
        wg_t = jnp.pad(wg_t, ((0, 0), (0, F_pad - F)))
        w2_t = jnp.pad(w2_t, ((0, F_pad - F), (0, 0)))
    nk = F_pad // tf
    # Fused weight: columns [k*2tf, k*2tf+tf) = W1 tile k, next tf = Wg tile k.
    w1g = jnp.concatenate(
        [w1_t.reshape(C, nk, tf), wg_t.reshape(C, nk, tf)], axis=2
    ).reshape(C, 2 * F_pad)
    return w1g, w2_t, tf


# ----------------------------------------------------------------------------
# forward
# ----------------------------------------------------------------------------
@functools.partial(jax.jit, static_argnames=("tf", "vmem_budget"))
def t5_feed_forward(x, w1g, w2, *, tf, vmem_budget=None):
    """x: [B, L, C]; w1g: [C, 2*F_pad]; w2: [F_pad, C]  ->  [B, L, C]."""
    B, L, C = x.shape
    F_pad = w2.shape[0]
    nk = F_pad // tf
    M = B * L

    xb = _itemsize(x.dtype)
    wb = _itemsize(w1g.dtype)
    w2b = _itemsize(w2.dtype)
    ob = xb
    if vmem_budget is None:
        vmem_budget = _vmem_budget_bytes()

    # --- token (M) tile: dtype-aware, as large as the VMEM budget allows -----
    sub = max(8, 32 // xb)  # sublane pack: 8 f32, 16 bf16, 32 int8/fp8
    weight_tile_bytes = 2 * (C * 2 * tf * wb + tf * C * w2b)  # double-buffered

    def _step_bytes(tm):
        b = 2 * tm * C * xb          # x tile, double-buffered
        b += 2 * tm * C * ob         # out tile, double-buffered
        b += tm * 2 * tf * 4         # f32 fc1|gate GEMM intermediate
        b += tm * tf * max(wb, 2)    # cast of h before the second GEMM
        if nk > 1:
            b += tm * C * 4          # f32 accumulator scratch
        return b

    remaining = int(0.85 * vmem_budget) - weight_tile_bytes
    tm = sub
    for cand in (1024, 768, 512, 384, 256, 128, 64, 32, 16, 8):
        if cand % sub != 0 or cand > _round_up(M, sub):
            continue
        if _step_bytes(cand) <= remaining:
            tm = cand
            break
    tm = max(tm, sub)
    M_pad = _round_up(M, tm)
    # Feed both TensorCores on v7x: keep >= 2 blocks along the parallel M axis.
    if M_pad // tm < 2 and M > sub:
        tm = _round_up(pl.cdiv(M, 2), sub)
        M_pad = _round_up(M, tm)
    num_m = M_pad // tm

    x2d = x.reshape(M, C)
    if M_pad != M:
        x2d = jnp.pad(x2d, ((0, M_pad - M), (0, 0)))

    # Weights are re-streamed once per M tile under this grid.
    cost = pl.CostEstimate(
        flops=6 * M_pad * C * F_pad,
        transcendentals=M_pad * F_pad,
        bytes_accessed=(
            M_pad * C * xb
            + M_pad * C * ob
            + num_m * (w1g.size * wb + w2.size * w2b)
        ),
    )
    vmem_limit = int(min(vmem_budget, 112 * _MIB))

    if nk == 1:
        grid_spec = pltpu.PrefetchScalarGridSpec(
            num_scalar_prefetch=0,
            grid=(num_m,),
            in_specs=[
                pl.BlockSpec((tm, C), lambda i: (i, 0)),        # x tile
                pl.BlockSpec((C, 2 * tf), lambda i: (0, 0)),    # fused W1|Wg (resident)
                pl.BlockSpec((tf, C), lambda i: (0, 0)),        # W2 (resident)
            ],
            out_specs=pl.BlockSpec((tm, C), lambda i: (i, 0)),
        )
        kernel = _ffn_kernel_single
        dims = ("parallel",)
    else:
        grid_spec = pltpu.PrefetchScalarGridSpec(
            num_scalar_prefetch=0,
            grid=(num_m, nk),  # reduction (F) axis last
            in_specs=[
                pl.BlockSpec((tm, C), lambda i, k: (i, 0)),     # x tile
                pl.BlockSpec((C, 2 * tf), lambda i, k: (0, k)), # fused W1|Wg tile
                pl.BlockSpec((tf, C), lambda i, k: (k, 0)),     # W2 tile
            ],
            out_specs=pl.BlockSpec((tm, C), lambda i, k: (i, 0)),
            scratch_shapes=[pltpu.VMEM((tm, C), jnp.float32)],  # f32 accumulator
        )
        kernel = _ffn_kernel_reduce
        dims = ("parallel", "arbitrary")

    out2d = pl.pallas_call(
        kernel,
        out_shape=jax.ShapeDtypeStruct((M_pad, C), x.dtype),
        grid_spec=grid_spec,
        compiler_params=pltpu.CompilerParams(
            dimension_semantics=dims,
            vmem_limit_bytes=vmem_limit,
        ),
        cost_estimate=cost,
    )(x2d, w1g, w2)

    return out2d[:M].reshape(B, L, C)


# ----------------------------------------------------------------------------
# reference + test
# ----------------------------------------------------------------------------
def _reference(x, w1_t, wg_t, w2_t):
    """Pure-JAX reference matching the PyTorch forward (eval mode, dropout=identity)."""
    h_fc1 = x @ w1_t
    h_gate = x @ wg_t
    g = 0.5 * h_gate * (1.0 + jnp.tanh(_GELU_C * (h_gate + 0.044715 * h_gate ** 3)))
    return (h_fc1 * g) @ w2_t


def _run_case(key, B, L, dim, dim_ffn, tf=None):
    kx, k1, kg, k2 = jax.random.split(key, 4)
    x = jax.random.normal(kx, (B, L, dim), dtype=jnp.float32)
    # PyTorch Linear weight is [out, in]; we store the transposed [in, out] layout.
    w1_t = jax.random.normal(k1, (dim, dim_ffn), dtype=jnp.float32) / math.sqrt(dim)
    wg_t = jax.random.normal(kg, (dim, dim_ffn), dtype=jnp.float32) / math.sqrt(dim)
    w2_t = jax.random.normal(k2, (dim_ffn, dim), dtype=jnp.float32) / math.sqrt(dim_ffn)

    w1g, w2_pad, tf_used = prepare_t5_ffn_weights(w1_t, wg_t, w2_t, tf=tf)
    out = t5_feed_forward(x, w1g, w2_pad, tf=tf_used)
    jax.block_until_ready(out)

    ref = _reference(x, w1_t, wg_t, w2_t)
    assert out.shape == (B, L, dim)
    assert jnp.allclose(out, ref, atol=1e-3, rtol=1e-3), "mismatch vs reference"


if __name__ == "__main__":
    key = jax.random.PRNGKey(0)
    k_a, k_b = jax.random.split(key)

    # Case 1: small shapes [B, L, C] = [2, 8, 32], dim_ffn=128.
    # Full weights fit VMEM -> single-pass kernel (nk=1), 2 parallel M tiles.
    _run_case(k_a, B=2, L=8, dim=32, dim_ffn=128)

    # Case 2: force the F-reduction path (tf=128, dim_ffn=320 -> padded to 384,
    # nk=3) and a non-divisible token count (M=20) to exercise padding.
    _run_case(k_b, B=2, L=10, dim=64, dim_ffn=320, tf=128)

    # TODO(synk): dropout is identity here (inference mode); training-mode dropout
    # would need pltpu.prng_seed + pltpu.stateful_bernoulli masks in-kernel.
    print("KERNEL_OK")
</pallas_src>

<mosaic_0001>
module attributes {stable_mosaic.version = 11 : i64} {
  func.func @_ffn_kernel_single(%arg0: i32, %arg1: memref<8x32xf32, #tpu.memory_space<vmem>>, %arg2: memref<32x256xf32, #tpu.memory_space<vmem>>, %arg3: memref<128x32xf32, #tpu.memory_space<vmem>>, %arg4: memref<8x32xf32, #tpu.memory_space<vmem>>) attributes {dimension_semantics = [#tpu.dimension_semantics<parallel>], iteration_bounds = array<i64: 2>, scalar_prefetch = 0 : i64, scratch_operands = 0 : i64, tpu.core_type = #tpu.core_type<tc>, window_params = [{transform_indices = @transform_0, window_bounds = array<i64: 8, 32>}, {pipeline_mode = #tpu.pipeline_mode<synchronous>, transform_indices = @transform_1, window_bounds = array<i64: 32, 256>}, {pipeline_mode = #tpu.pipeline_mode<synchronous>, transform_indices = @transform_2, window_bounds = array<i64: 128, 32>}, {transform_indices = @transform_3, window_bounds = array<i64: 8, 32>}]} {
    %c0 = arith.constant 0 : index
    %c0_0 = arith.constant 0 : index
    %0 = vector.load %arg1[%c0, %c0_0] : memref<8x32xf32, #tpu.memory_space<vmem>>, vector<8x32xf32>
    %c0_1 = arith.constant 0 : index
    %c0_2 = arith.constant 0 : index
    %1 = vector.load %arg2[%c0_1, %c0_2] : memref<32x256xf32, #tpu.memory_space<vmem>>, vector<32x256xf32>
    %cst = arith.constant dense<0.000000e+00> : vector<8x256xf32>
    %2 = tpu.matmul %0, %1, %cst {dimension_numbers = #tpu.dot_dimension_numbers<[1], [0], [0], [1], [0, 0, 1, 1], [], []>} : vector<8x32xf32>, vector<32x256xf32>, vector<8x256xf32> -> vector<8x256xf32>
    %3 = vector.extract_strided_slice %2 {offsets = [0, 0], sizes = [8, 128], strides = [1, 1]} : vector<8x256xf32> to vector<8x128xf32>
    %4 = vector.extract_strided_slice %2 {offsets = [0, 128], sizes = [8, 128], strides = [1, 1]} : vector<8x256xf32> to vector<8x128xf32>
    %5 = arith.mulf %4, %4 : vector<8x128xf32>
    %6 = arith.mulf %5, %4 : vector<8x128xf32>
    %cst_3 = arith.constant 5.000000e-01 : f32
    %7 = vector.broadcast %cst_3 : f32 to vector<8x128xf32>
    %8 = arith.mulf %7, %4 : vector<8x128xf32>
    %cst_4 = arith.constant 4.471500e-02 : f32
    %9 = vector.broadcast %cst_4 : f32 to vector<8x128xf32>
    %10 = arith.mulf %9, %6 : vector<8x128xf32>
    %11 = arith.addf %4, %10 : vector<8x128xf32>
    %cst_5 = arith.constant 0.797884583 : f32
    %12 = vector.broadcast %cst_5 : f32 to vector<8x128xf32>
    %13 = arith.mulf %12, %11 : vector<8x128xf32>
    %14 = math.tanh %13 : vector<8x128xf32>
    %cst_6 = arith.constant 1.000000e+00 : f32
    %15 = vector.broadcast %cst_6 : f32 to vector<8x128xf32>
    %16 = arith.addf %15, %14 : vector<8x128xf32>
    %17 = arith.mulf %8, %16 : vector<8x128xf32>
    %18 = arith.mulf %3, %17 : vector<8x128xf32>
    %c0_7 = arith.constant 0 : index
    %c0_8 = arith.constant 0 : index
    %19 = vector.load %arg3[%c0_7, %c0_8] : memref<128x32xf32, #tpu.memory_space<vmem>>, vector<128x32xf32>
    %cst_9 = arith.constant dense<0.000000e+00> : vector<8x32xf32>
    %20 = tpu.matmul %18, %19, %cst_9 {dimension_numbers = #tpu.dot_dimension_numbers<[1], [0], [0], [1], [0, 0, 1, 1], [], []>} : vector<8x128xf32>, vector<128x32xf32>, vector<8x32xf32> -> vector<8x32xf32>
    %c0_10 = arith.constant 0 : index
    %c0_11 = arith.constant 0 : index
    %21 = vector.load %arg4[%c0_10, %c0_11] : memref<8x32xf32, #tpu.memory_space<vmem>>, vector<8x32xf32>
    tpu.vector_store %arg4[%c0_10, %c0_11], %20 {strides = array<i32>} : memref<8x32xf32, #tpu.memory_space<vmem>>, vector<8x32xf32>,
    return
  }
  func.func @transform_0(%arg0: i32) -> (i32, i32) {
    %c0_i32 = arith.constant 0 : i32
    %c0_i32_0 = arith.constant 0 : i32
    return %arg0, %c0_i32 : i32, i32
  }
  func.func @transform_1(%arg0: i32) -> (i32, i32) {
    %c0_i32 = arith.constant 0 : i32
    %c0_i32_0 = arith.constant 0 : i32
    %c0_i32_1 = arith.constant 0 : i32
    return %c0_i32, %c0_i32_0 : i32, i32
  }
  func.func @transform_2(%arg0: i32) -> (i32, i32) {
    %c0_i32 = arith.constant 0 : i32
    %c0_i32_0 = arith.constant 0 : i32
    %c0_i32_1 = arith.constant 0 : i32
    return %c0_i32, %c0_i32_0 : i32, i32
  }
  func.func @transform_3(%arg0: i32) -> (i32, i32) {
    %c0_i32 = arith.constant 0 : i32
    %c0_i32_0 = arith.constant 0 : i32
    return %arg0, %c0_i32 : i32, i32
  }
}

</mosaic_0001>

<llo_original>
// kernel: t5_feed_forward.1
$region0: #{t5_feed_forward.1}
  #allocation0 [shape = 'u32[]', space=smem, size = 0x4, offset = 0x4, fixed_abs, tag = 'smem constant byte address 0x4 - core index']
  #allocation1 [shape = 'u32[144,128]{1,0:T(1,128)}', space=vmem, size = 0x12000, scoped, tag = 'internal scratch']
  %s0 = inlined_call_operand.vmem [shape: f32[16,32], index: 0, kind: input, shape index: {}]
  %s1 = inlined_call_operand.vmem [shape: f32[32,256], index: 1, kind: input, shape index: {}]
  %s2 = inlined_call_operand.vmem [shape: f32[128,32], index: 2, kind: input, shape index: {}]
  %s3 = inlined_call_operand.hbm [shape: f32[16,32], index: 3, kind: output, shape index: {}]
  %s4 = sld [smem:[#allocation0]]
  $region45: #{t5_feed_forward.1} parent=0
    _
  %s6 = ssub.s32 1, %s4
  %s7 = scalar_select 0, %s6, %s4
  $region1: #{t5_feed_forward.1} parent=0
    #allocation2 [shape = 'u8[8192]{0}', space=vmem, size = 0x2000, scoped, tag = 'output window, operand 0']
    #allocation3 [shape = 's32[2]{0}', space=sflag, size = 0x8, scoped, tag = 'scoped memory for t5_feed_forward.1']
    %8 = vsyncpa [#allocation3], 0
    %s9 = scalar_lea.sflag [#allocation3], 1
    %10 = vsyncpa %s9, 0
    loop: start=0, step=1, limit=4
    $region2: #{t5_feed_forward.1} parent=1 // loop_pre_header
      _
    $region3: #{t5_feed_forward.1} parent=1 // loop_header
      %s12 = sphi 0, %s16
      %p13 = scmp.ge.s32.totalorder %s12, 4
      %s22 = sphi 0, %s24
      %s25 = sphi 0, %s22
      %s26 = sphi 0, %s25
      %s42 = sphi 0, %s26
      %s46 = sphi 0, %s46
      %s48 = sphi 0, %s46
      %s49 = sphi 0, %s48
      %s63 = sphi 0, %s49
      %s67 = sphi 0, %s67
      %s69 = sphi 0, %s67
      %s70 = sphi 0, %s69
      %s84 = sphi 0, %s70
      %s90 = sphi 0, %s92
      %s93 = sphi 0, %s90
      %s94 = sphi 0, %s93
      %s110 = sphi 0, %s94
    $region4: #{t5_feed_forward.1} parent=1 // loop_header_branch
      %15 = sbr.rel (%p13) target = $region8
    $region5: #{t5_feed_forward.1} parent=1 // loop_body
      %s17 = ssub.s32 %s12, 1
      %s18 = ssub.s32 %s12, 2
      %s19 = sadd.s32 %s12, 1
      %s20 = ssub.s32 %s12, %s19
      %p21 = scmp.eq.s32.totalorder %s20, 0
      %s23 = sadd.s32 %s22, 1
      %s24 = scalar_select %p21, %s22, %s23
      %p27 = pneg %p21
      %p28 = scmp.eq.s32.totalorder %s12, 1
      %p29 = por %p27, %p28
      %p30 = scmp.ne.s32.totalorder %s22, %s25
      %p31 = scmp.eq.s32.totalorder %s12, 0
      %p32 = por %p30, %p31
      %p33 = scmp.ne.s32.totalorder %s22, %s25
      %p34 = scmp.eq.s32.totalorder %s17, 1
      %p35 = por %p33, %p34
      %p36 = scmp.ne.s32.totalorder %s25, %s26
      %p37 = scmp.eq.s32.totalorder %s17, 0
      %p38 = por %p36, %p37
      %p39 = scmp.ne.s32.totalorder %s25, %s26
      %p40 = scmp.eq.s32.totalorder %s18, 1
      %p41 = por %p39, %p40
      %p43 = scmp.ne.s32.totalorder %s26, %s42
      %p44 = scmp.eq.s32.totalorder %s18, 0
      %p45 = por %p43, %p44
      %s47 = sadd.s32 %s46, 1
      %p50 = scmp.eq.s32.totalorder %s12, 1
      %p51 = scmp.ne.s32.totalorder %s46, %s48
      %p52 = scmp.eq.s32.totalorder %s12, 0
      %p53 = por %p51, %p52
      %p54 = scmp.ne.s32.totalorder %s46, %s48
      %p55 = scmp.eq.s32.totalorder %s17, 1
      %p56 = por %p54, %p55
      %p57 = scmp.ne.s32.totalorder %s48, %s49
      %p58 = scmp.eq.s32.totalorder %s17, 0
      %p59 = por %p57, %p58
      %p60 = scmp.ne.s32.totalorder %s48, %s49
      %p61 = scmp.eq.s32.totalorder %s18, 1
      %p62 = por %p60, %p61
      %p64 = scmp.ne.s32.totalorder %s49, %s63
      %p65 = scmp.eq.s32.totalorder %s18, 0
      %p66 = por %p64, %p65
      %s68 = sadd.s32 %s67, 1
      %p71 = scmp.eq.s32.totalorder %s12, 1
      %p72 = scmp.ne.s32.totalorder %s67, %s69
      %p73 = scmp.eq.s32.totalorder %s12, 0
      %p74 = por %p72, %p73
      %p75 = scmp.ne.s32.totalorder %s67, %s69
      %p76 = scmp.eq.s32.totalorder %s17, 1
      %p77 = por %p75, %p76
      %p78 = scmp.ne.s32.totalorder %s69, %s70
      %p79 = scmp.eq.s32.totalorder %s17, 0
      %p80 = por %p78, %p79
      %p81 = scmp.ne.s32.totalorder %s69, %s70
      %p82 = scmp.eq.s32.totalorder %s18, 1
      %p83 = por %p81, %p82
      %p85 = scmp.ne.s32.totalorder %s70, %s84
      %p86 = scmp.eq.s32.totalorder %s18, 0
      %p87 = por %p85, %p86
      %s88 = ssub.s32 %s12, %s19
      %p89 = scmp.eq.s32.totalorder %s88, 0
      %s91 = sadd.s32 %s90, 1
      %s92 = scalar_select %p89, %s90, %s91
      %p95 = pneg %p89
      %p96 = scmp.eq.s32.totalorder %s12, 1
      %p97 = por %p95, %p96
      %p98 = scmp.ne.s32.totalorder %s90, %s93
      %p99 = scmp.eq.s32.totalorder %s12, 0
      %p100 = por %p98, %p99
      %p101 = scmp.ne.s32.totalorder %s90, %s93
      %p102 = scmp.eq.s32.totalorder %s17, 1
      %p103 = por %p101, %p102
      %p104 = scmp.ne.s32.totalorder %s93, %s94
      %p105 = scmp.eq.s32.totalorder %s17, 0
      %p106 = por %p104, %p105
      %p107 = scmp.ne.s32.totalorder %s93, %s94
      %p108 = scmp.eq.s32.totalorder %s18, 1
      %p109 = por %p107, %p108
      %p111 = scmp.ne.s32.totalorder %s94, %s110
      %p112 = scmp.eq.s32.totalorder %s18, 0
      %p113 = por %p111, %p112
      %p114 = scmp.le.s32.totalorder 1, %s12
      %p115 = scmp.lt.s32.totalorder %s12, 3
      %p116 = pnand %p114, %p115
      %p117 = pneg %p116
      // Predicated region
      $region9: #{t5_feed_forward.1} parent=5 // pred_check
        _
      $region10: #{t5_feed_forward.1} parent=5 // pred_check_branch
        %119 = sbr.rel (%p116) target = $region12
      $region11: #{t5_feed_forward.1} parent=5 // pred_region
        %s120 = ssub.s32 %s12, 1
        // Predicated region
        $region13: #{t5_feed_forward.1} parent=11 // pred_check
          %p121 = pneg %p59
        $region14: #{t5_feed_forward.1} parent=11 // pred_check_branch
          %123 = sbr.rel (%p121) target = $region16
        $region15: #{t5_feed_forward.1} parent=11 // pred_region
          _
        $region16: #{t5_feed_forward.1} parent=11 // pred_fallthru
          _
        // Predicated region
        $region17: #{t5_feed_forward.1} parent=11 // pred_check
          %p124 = pneg %p80
        $region18: #{t5_feed_forward.1} parent=11 // pred_check_branch
          %126 = sbr.rel (%p124) target = $region20
        $region19: #{t5_feed_forward.1} parent=11 // pred_region
          _
        $region20: #{t5_feed_forward.1} parent=11 // pred_fallthru
          _
      $region12: #{t5_feed_forward.1} parent=5 // pred_fallthru
        _
      %p127 = scmp.lt.s32.totalorder %s12, 2
      // Predicated region
      $region21: #{t5_feed_forward.1} parent=5 // pred_check
        %p128 = pneg %p127
      $region22: #{t5_feed_forward.1} parent=5 // pred_check_branch
        %130 = sbr.rel (%p128) target = $region24
      $region23: #{t5_feed_forward.1} parent=5 // pred_region
        // Predicated region
        $region25: #{t5_feed_forward.1} parent=23 // pred_check
          %p131 = pneg %p32
        $region26: #{t5_feed_forward.1} parent=23 // pred_check_branch
          %133 = sbr.rel (%p131) target = $region28
        $region27: #{t5_feed_forward.1} parent=23 // pred_region
          %p134 = scmp.lt.s32.totalorder %s12, 1
          %s135 = scalar_select %p134, %s12, 1
          %s136 = smul.addr %s135, 8
          %s137 = scalar_lea.vmem %s0, %s136
        $region28: #{t5_feed_forward.1} parent=23 // pred_fallthru
          _
      $region24: #{t5_feed_forward.1} parent=5 // pred_fallthru
        _
      %p138 = scmp.le.s32.totalorder 1, %s12
      %p139 = scmp.lt.s32.totalorder %s12, 3
      %p140 = pnand %p138, %p139
      %p141 = pneg %p140
      // Predicated region
      $region29: #{t5_feed_forward.1} parent=5 // pred_check
        _
      $region30: #{t5_feed_forward.1} parent=5 // pred_check_branch
        %143 = sbr.rel (%p140) target = $region32
      $region31: #{t5_feed_forward.1} parent=5 // pred_region
        %s144 = ssub.s32 %s12, 1
        %p145 = scmp.lt.s32.totalorder %s17, 1
        %s146 = scalar_select %p145, %s17, 1
        %s147 = smul.addr %s146, 8
        %s148 = scalar_lea.vmem %s0, %s147
        %p149 = pneg %p38
        %p150 = pneg %p35
        %p151 = pneg %p59
        %p152 = pneg %p56
        %p153 = pneg %p80
        %p154 = pneg %p77
        %p155 = pneg %p106
        %p156 = pneg %p103
        %s157 = sand.u32 %s93, 1
        %s158 = scalar_lea.sflag [#allocation3], %s157
        %s159 = sand.u32 %s93, 1
        %s160 = smul.addr %s159, 8
        %s161 = scalar_lea.vmem [#allocation2], %s160
        %p162 = scmp.lt.s32.totalorder %s17, 1
        %s163 = scalar_select %p162, %s17, 1
        %s164 = smul.addr %s163, 8
        %s165 = scalar_lea.vmem %s0, %s164
        %v166 = vld [vmem:[%s165] sm:$0xff]
        %v167 = vld [vmem:[%s1] sm:$0xff]
        %v168 = vld [vmem:[%s1 + $0x8] sm:$0xff]
        %v169 = vld [vmem:[%s1 + $0x10] sm:$0xff]
        %v170 = vld [vmem:[%s1 + $0x18] sm:$0xff]
        %v171 = vld [vmem:[%s1 + $0x20] sm:$0xff]
        %v172 = vld [vmem:[%s1 + $0x28] sm:$0xff]
        %v173 = vld [vmem:[%s1 + $0x30] sm:$0xff]
        %v174 = vld [vmem:[%s1 + $0x38] sm:$0xff]
        %vm175 = vcmask 261120
        %v177 = vsel %vm175, %v166, 0
        %179 = vmatprep.subr.mxu0 %v168
        %180 = vmatpush1.msra.mxu0 %v167
        %181 = vmatprep.subr.mxu0 %v170
        %182 = vmatpush1.msra.mxu0 %v169
        %183 = vmatprep.subr.mxu0 %v172
        %184 = vmatpush1.msra.mxu0 %v171
        %185 = vmatprep.subr.mxu0 %v174
        %186 = vmatpush1.msra.mxu0 %v173
        %187 = vmatprep.subr.mxu0 0.0
        %188 = vmatpush1.msra.mxu0 0.0
        %189 = vmatprep.subr.mxu0 0.0
        %190 = vmatpush1.msra.mxu0 0.0
        %191 = vmatprep.subr.mxu0 0.0
        %192 = vmatpush1.msra.mxu0 0.0
        %193 = vmatprep.subr.mxu0 0.0
        %194 = vmatpush1.msra.mxu0 0.0
        %195 = vmatprep.subr.mxu0 0.0
        %196 = vmatpush1.msra.mxu0 0.0
        %197 = vmatprep.subr.mxu0 0.0
        %198 = vmatpush1.msra.mxu0 0.0
        %199 = vmatprep.subr.mxu0 0.0
        %200 = vmatpush1.msra.mxu0 0.0
        %201 = vmatprep.subr.mxu0 0.0
        %202 = vmatpush1.msra.mxu0 0.0
        %203 = vmatprep.subr.mxu0 0.0
        %204 = vmatpush1.msra.mxu0 0.0
        %205 = vmatprep.subr.mxu0 0.0
        %206 = vmatpush1.msra.mxu0 0.0
        %207 = vmatprep.subr.mxu0 0.0
        %208 = vmatpush1.msra.mxu0 0.0
        %209 = vmatprep.subr.mxu0 0.0
        %210 = vmatpush1.msra.mxu0 0.0
        %211 = vmatprep.subr.mxu0 0.0
        %212 = vmatpush1.msra.mxu0 0.0
        %213 = vmatprep.subr.mxu0 0.0
        %214 = vmatpush1.msra.mxu0 0.0
        %215 = vmatprep.subr.mxu0 0.0
        %216 = vmatpush1.msra.mxu0 0.0
        %217 = vmatprep.subr.mxu0 0.0
        %218 = vmatpush1.msra.mxu0 0.0
        %219 = vmatprep.subr.mxu0 0.0
        %220 = vmatpush1.msra.mxu0 0.0
        %221 = vmatprep.subr.mxu0 0.0
        %222 = vmatpush1.msra.mxu0 0.0
        %223 = vmatprep.subr.mxu0 0.0
        %224 = vmatpush1.msra.mxu0 0.0
        %225 = vmatprep.subr.mxu0 0.0
        %226 = vmatpush1.msra.mxu0 0.0
        %227 = vmatprep.subr.mxu0 0.0
        %228 = vmatpush1.msra.mxu0 0.0
        %229 = vmatprep.subr.mxu0 0.0
        %230 = vmatpush1.msra.mxu0 0.0
        %231 = vmatprep.subr.mxu0 0.0
        %232 = vmatpush1.msra.mxu0 0.0
        %233 = vmatprep.subr.mxu0 0.0
        %234 = vmatpush1.msra.mxu0 0.0
        %235 = vmatprep.subr.mxu0 0.0
        %236 = vmatpush1.msra.mxu0 0.0
        %237 = vmatprep.subr.mxu0 0.0
        %238 = vmatpush1.msra.mxu0 0.0
        %239 = vmatprep.subr.mxu0 0.0
        %240 = vmatpush1.msra.mxu0 0.0
        %241 = vmatprep.subr.mxu0 0.0
        %242 = vmatpush1.msra.mxu0 0.0
        %243 = vmatprep.mubr.f32.mxu0 0.0
        %244 = vmatmul.mubr.f32.gmra.mrb[0].mxu0 %v177
        %v245 = vpop.f32.mrb[0].mxu0
        %v246 = vadd.f32 0.0, %v245
        %v247 = vpop.f32.mrb[0].mxu0
        %v248 = vadd.f32 0.0, %v247
        %249 = vdwg.mxu0
        %v250 = vmul.f32 %v248, %v248
        %v251 = vmul.f32 %v250, %v248
        %v252 = vmul.f32 %v248, 0.5
        %v253 = vmul.f32 %v251, 0.044715
        %v254 = vadd.f32 %v248, %v253
        %v255 = vmul.f32 %v254, 0.7978846
        %v256 = vtanh.pop %v255
        %v257 = vadd.f32 %v256, 1.0
        %v258 = vmul.f32 %v252, %v257
        %v259 = vmul.f32 %v246, %v258
        %v260 = vld [vmem:[%s2] sm:$0xff]
        %v261 = vld [vmem:[%s2 + $0x8] sm:$0xff]
        %v262 = vld [vmem:[%s2 + $0x10] sm:$0xff]
        %v263 = vld [vmem:[%s2 + $0x18] sm:$0xff]
        %v264 = vld [vmem:[%s2 + $0x20] sm:$0xff]
        %v265 = vld [vmem:[%s2 + $0x28] sm:$0xff]
        %v266 = vld [vmem:[%s2 + $0x30] sm:$0xff]
        %v267 = vld [vmem:[%s2 + $0x38] sm:$0xff]
        %v268 = vld [vmem:[%s2 + $0x40] sm:$0xff]
        %v269 = vld [vmem:[%s2 + $0x48] sm:$0xff]
        %v270 = vld [vmem:[%s2 + $0x50] sm:$0xff]
        %v271 = vld [vmem:[%s2 + $0x58] sm:$0xff]
        %v272 = vld [vmem:[%s2 + $0x60] sm:$0xff]
        %v273 = vld [vmem:[%s2 + $0x68] sm:$0xff]
        %v274 = vld [vmem:[%s2 + $0x70] sm:$0xff]
        %v275 = vld [vmem:[%s2 + $0x78] sm:$0xff]
        %276 = vmatprep.subr.mxu0 0.0
        %277 = vmatpush1.msra.mxu0 %v260
        %278 = vmatprep.subr.mxu0 0.0
        %279 = vmatpush1.msra.mxu0 %v261
        %280 = vmatprep.subr.mxu0 0.0
        %281 = vmatpush1.msra.mxu0 %v262
        %282 = vmatprep.subr.mxu0 0.0
        %283 = vmatpush1.msra.mxu0 %v263
        %284 = vmatprep.subr.mxu0 0.0
        %285 = vmatpush1.msra.mxu0 %v264
        %286 = vmatprep.subr.mxu0 0.0
        %287 = vmatpush1.msra.mxu0 %v265
        %288 = vmatprep.subr.mxu0 0.0
        %289 = vmatpush1.msra.mxu0 %v266
        %290 = vmatprep.subr.mxu0 0.0
        %291 = vmatpush1.msra.mxu0 %v267
        %292 = vmatprep.subr.mxu0 0.0
        %293 = vmatpush1.msra.mxu0 %v268
        %294 = vmatprep.subr.mxu0 0.0
        %295 = vmatpush1.msra.mxu0 %v269
        %296 = vmatprep.subr.mxu0 0.0
        %297 = vmatpush1.msra.mxu0 %v270
        %298 = vmatprep.subr.mxu0 0.0
        %299 = vmatpush1.msra.mxu0 %v271
        %300 = vmatprep.subr.mxu0 0.0
        %301 = vmatpush1.msra.mxu0 %v272
        %302 = vmatprep.subr.mxu0 0.0
        %303 = vmatpush1.msra.mxu0 %v273
        %304 = vmatprep.subr.mxu0 0.0
        %305 = vmatpush1.msra.mxu0 %v274
        %306 = vmatprep.subr.mxu0 0.0
        %307 = vmatpush1.msra.mxu0 %v275
        %308 = vmatprep.subr.mxu0 0.0
        %309 = vmatpush1.msra.mxu0 0.0
        %310 = vmatprep.subr.mxu0 0.0
        %311 = vmatpush1.msra.mxu0 0.0
        %312 = vmatprep.subr.mxu0 0.0
        %313 = vmatpush1.msra.mxu0 0.0
        %314 = vmatprep.subr.mxu0 0.0
        %315 = vmatpush1.msra.mxu0 0.0
        %316 = vmatprep.subr.mxu0 0.0
        %317 = vmatpush1.msra.mxu0 0.0
        %318 = vmatprep.subr.mxu0 0.0
        %319 = vmatpush1.msra.mxu0 0.0
        %320 = vmatprep.subr.mxu0 0.0
        %321 = vmatpush1.msra.mxu0 0.0
        %322 = vmatprep.subr.mxu0 0.0
        %323 = vmatpush1.msra.mxu0 0.0
        %324 = vmatprep.subr.mxu0 0.0
        %325 = vmatpush1.msra.mxu0 0.0
        %326 = vmatprep.subr.mxu0 0.0
        %327 = vmatpush1.msra.mxu0 0.0
        %328 = vmatprep.subr.mxu0 0.0
        %329 = vmatpush1.msra.mxu0 0.0
        %330 = vmatprep.subr.mxu0 0.0
        %331 = vmatpush1.msra.mxu0 0.0
        %332 = vmatprep.subr.mxu0 0.0
        %333 = vmatpush1.msra.mxu0 0.0
        %334 = vmatprep.subr.mxu0 0.0
        %335 = vmatpush1.msra.mxu0 0.0
        %336 = vmatprep.subr.mxu0 0.0
        %337 = vmatpush1.msra.mxu0 0.0
        %338 = vmatprep.subr.mxu0 0.0
        %339 = vmatpush1.msra.mxu0 0.0
        %340 = vmatprep.mubr.f32.mxu0 0.0
        %341 = vmatmul.mubr.f32.gmra.mrb[0].mxu0 %v259
        %v342 = vpop.f32.mrb[0].mxu0
        %v343 = vadd.f32 0.0, %v342
        %v344 = vpop.f32.mrb[0].mxu0
        %345 = vdwg.mxu0
        %346 = vst.msk [vmem:[%s161] sm:$0xff] %vm175, %v343
        %s347 = sand.u32 %s93, 1
        %s348 = scalar_lea.sflag [#allocation3], %s347
        %s349 = sand.u32 %s93, 1
        %s350 = smul.addr %s349, 8
        %s351 = scalar_lea.vmem [#allocation2], %s350
        // Predicated region
        $region33: #{t5_feed_forward.1} parent=31 // pred_check
          %p352 = pneg %p103
        $region34: #{t5_feed_forward.1} parent=31 // pred_check_branch
          %354 = sbr.rel (%p352) target = $region36
        $region35: #{t5_feed_forward.1} parent=31 // pred_region
          %s356 = ssub.s32 128, 128
          %357 = vsyncadd %s348, %s356
          %s358 = smul.addr %s17, 128
          %s359 = scalar_lea.hbm %s3, %s358
          %s361 = sshll.u32 %s351, 4
          %s362 = int_to_ptr.vmem [resolvable:$true] %s361
          %364 = dma.vmem_to_hbm [thread:$0]  %s362, 128, %s359, %s348
        $region36: #{t5_feed_forward.1} parent=31 // pred_fallthru
          _
      $region32: #{t5_feed_forward.1} parent=5 // pred_fallthru
        _
      %p365 = scmp.le.s32.totalorder 2, %s12
      // Predicated region
      $region37: #{t5_feed_forward.1} parent=5 // pred_check
        %p366 = pneg %p365
      $region38: #{t5_feed_forward.1} parent=5 // pred_check_branch
        %368 = sbr.rel (%p366) target = $region40
      $region39: #{t5_feed_forward.1} parent=5 // pred_region
        %s369 = ssub.s32 %s12, 2
        // Predicated region
        $region41: #{t5_feed_forward.1} parent=39 // pred_check
          %p370 = pneg %p109
        $region42: #{t5_feed_forward.1} parent=39 // pred_check_branch
          %372 = sbr.rel (%p370) target = $region44
        $region43: #{t5_feed_forward.1} parent=39 // pred_region
          %s373 = sand.u32 %s94, 1
          %s374 = scalar_lea.sflag [#allocation3], %s373
          %s375 = sand.u32 %s94, 1
          %s376 = smul.addr %s375, 8
          %s377 = scalar_lea.vmem [#allocation2], %s376
          %378 = dma.done %s374, 128
        $region44: #{t5_feed_forward.1} parent=39 // pred_fallthru
          _
      $region40: #{t5_feed_forward.1} parent=5 // pred_fallthru
        _
    $region6: #{t5_feed_forward.1} parent=1 // loop_footer
      %s16 = sadd.s32 1, %s12
    $region7: #{t5_feed_forward.1} parent=1 // loop_footer_branch
      %11 = sbr.rel target = $region3
    $region8: #{t5_feed_forward.1} parent=1 // loop_exit
      _
    %379 = vsyncpa [#allocation3], 1
    %s380 = scalar_lea.sflag [#allocation3], 1
    %381 = vsyncpa %s380, 1

</llo_original>
